<compile_context>
chip_gen: v6e
topology: v6e:2x2x1
jax: 0.10.0
libtpu: 0.0.40
codegen_flags: <defaults>
</compile_context>

<pallas_src>
import functools

import numpy as np
import jax
import jax.numpy as jnp
from jax.experimental import pallas as pl
from jax.experimental.pallas import tpu as pltpu

_LANE = 128   # lane width; xyz (3) is zero-padded up to this
_SUB = 8      # sublane width


def _round_up(x, m):
    return ((x + m - 1) // m) * m


# ---------------------------------------------------------------------------
# Hardware detection / tile planning (done once at module construction).
# ---------------------------------------------------------------------------
def _detect_tpu():
    kind = ""
    try:
        kind = jax.devices()[0].device_kind.lower()
    except Exception:
        pass
    vmem = None
    try:
        vmem = int(pltpu.get_tpu_info().vmem_capacity_bytes)
    except Exception:
        vmem = None
    if not vmem or vmem <= 0:
        vmem = 64 * 1024 * 1024   # conservative: v7x per-TensorCore VMEM
    return min(vmem, 128 * 1024 * 1024), kind


def _is_v5e(kind):
    return ("v5 lite" in kind) or ("v5e" in kind) or ("v5litepod" in kind)


def _plan_tiles(M, N, itemsize, vmem_bytes):
    """Pick (tm, tk, vp_resident, vmem_limit_bytes) for this chip's VMEM."""
    m_full = _round_up(max(int(M), 1), _SUB)
    n_full = _round_up(max(int(N), 1), _LANE)
    budget = int(vmem_bytes * 0.7)          # headroom for compiler scratch

    vp_bytes = n_full * _LANE * itemsize    # padded V' slab
    vp_resident = vp_bytes <= budget // 4   # fetch V' once, keep K-resident

    def usage(tm, tk):
        u = 2 * tm * tk * itemsize                                  # L (dbl-buf)
        u += vp_bytes if vp_resident else 2 * tk * _LANE * itemsize # V'
        u += 2 * tm * _LANE * 4                                     # delta_V
        u += tm * _LANE * 4                                         # acc scratch
        u += 2 * _SUB * _LANE * 4                                   # out tile
        return u

    tm_cands = sorted({t for t in (1024, 512, 256, 128, 64, 32, 16, 8)
                       if t <= m_full} | {m_full}, reverse=True)
    tk_cands = sorted({t for t in (4096, 2048, 1024, 512, 256, 128)
                       if t <= n_full} | {n_full}, reverse=True)

    tm, tk = tm_cands[-1], tk_cands[-1]
    done = False
    for tk_c in tk_cands:                  # prefer long contiguous L DMA rows
        for tm_c in tm_cands:
            if usage(tm_c, tk_c) <= budget:
                tm, tk, done = tm_c, tk_c, True
                break
        if done:
            break

    # v7x has 2 TensorCores: guarantee >= 2 row blocks so the "parallel" row
    # axis can be split across cores (near-free on 1-TC v5e/v6e).
    if tm >= m_full and m_full >= 2 * _SUB:
        tm = _round_up(m_full // 2, _SUB)

    vmem_limit = int(min(vmem_bytes * 0.9, max(32 * 1024 * 1024,
                                               2 * usage(tm, tk))))
    return tm, tk, vp_resident, vmem_limit


# ---------------------------------------------------------------------------
# Pallas kernel: tiled MXU matmul with K-axis accumulation in VMEM, masked
# squared-error finalized once per row block into a lane-dense partial tile.
# ---------------------------------------------------------------------------
def _laplacian_loss_kernel(l_ref, vp_ref, dv_ref, out_ref, acc_ref,
                           *, vp_resident):
    k = pl.program_id(1)

    @pl.when(k == 0)
    def _():
        acc_ref[...] = jnp.zeros_like(acc_ref)

    tk = l_ref.shape[1]
    if vp_resident:
        # V' slab lives in VMEM for the whole kernel; slice the current K tile.
        start = pl.multiple_of(k * tk, _LANE)
        vp = vp_ref[pl.ds(start, tk), :]
    else:
        vp = vp_ref[...]

    # (TM, TK) @ (TK, 128) -> (TM, 128), f32 accumulation on the MXU.
    acc_ref[...] += jnp.dot(l_ref[...], vp, preferred_element_type=jnp.float32)

    @pl.when(k == pl.num_programs(1) - 1)
    def _():
        diff = acc_ref[...] - dv_ref[...]          # f32 epilogue (v5e-safe)
        sq = diff * diff
        tm = sq.shape[0]
        # Fold sublane groups: (TM,128) -> (TM/8, 8, 128) -> sum -> (8, 128).
        out_ref[...] = jnp.sum(sq.reshape(tm // _SUB, _SUB, _LANE), axis=0)


def _laplacian_loss_from_padded(l_p, v_prime, dv_p, *, n, tm, tk,
                                vp_resident, vmem_limit_bytes):
    """loss from pre-padded masked L (m_pad, n_pad) and delta_V (m_pad, 128)."""
    m_pad, n_pad = l_p.shape
    matmul_dtype = l_p.dtype
    n_row_blocks = m_pad // tm
    n_k_blocks = n_pad // tk

    # Only per-call padding/cast: the small (N,3) V' -> lane-dense slab.
    vp_p = jnp.zeros((n_pad, _LANE), matmul_dtype).at[:n, :3].set(
        v_prime.astype(matmul_dtype))

    if vp_resident:
        vp_spec = pl.BlockSpec((n_pad, _LANE), lambda i, k: (0, 0))
    else:
        vp_spec = pl.BlockSpec((tk, _LANE), lambda i, k: (k, 0))

    itemsize = jnp.dtype(matmul_dtype).itemsize
    cost = pl.CostEstimate(
        flops=2 * m_pad * n_pad * _LANE,
        transcendentals=0,
        bytes_accessed=(m_pad * n_pad * itemsize                       # L
                        + (1 if vp_resident else n_row_blocks)
                        * n_pad * _LANE * itemsize                     # V'
                        + m_pad * _LANE * 4                            # delta_V
                        + n_row_blocks * _SUB * _LANE * 4))            # out

    kernel = functools.partial(_laplacian_loss_kernel, vp_resident=vp_resident)

    partials = pl.pallas_call(
        kernel,
        out_shape=jax.ShapeDtypeStruct((n_row_blocks * _SUB, _LANE),
                                       jnp.float32),
        grid_spec=pltpu.PrefetchScalarGridSpec(
            num_scalar_prefetch=0,
            grid=(n_row_blocks, n_k_blocks),
            in_specs=[
                pl.BlockSpec((tm, tk), lambda i, k: (i, k)),      # L block
                vp_spec,                                          # V'
                pl.BlockSpec((tm, _LANE), lambda i, k: (i, 0)),   # delta_V
            ],
            out_specs=pl.BlockSpec((_SUB, _LANE), lambda i, k: (i, 0)),
            scratch_shapes=[pltpu.VMEM((tm, _LANE), jnp.float32)],
        ),
        compiler_params=pltpu.CompilerParams(
            dimension_semantics=("parallel", "arbitrary"),
            vmem_limit_bytes=vmem_limit_bytes),
        cost_estimate=cost,
    )(l_p, vp_p, dv_p)

    return jnp.sum(partials)


# ---------------------------------------------------------------------------
# Deterministic, in-script construction of the "module parameters"
# (replaces trimesh: grid mesh + inverse-edge-length row-normalized laplacian).
# ---------------------------------------------------------------------------
def build_grid_mesh(n=8):
    xs, ys = np.meshgrid(np.arange(n, dtype=np.float32),
                         np.arange(n, dtype=np.float32), indexing="ij")
    zs = 0.1 * np.sin(xs) * np.cos(ys)
    verts = np.stack([xs.ravel(), ys.ravel(), zs.ravel()],
                     axis=1).astype(np.float32)
    faces = []
    for i in range(n - 1):
        for j in range(n - 1):
            v00 = i * n + j
            v01 = i * n + (j + 1)
            v10 = (i + 1) * n + j
            v11 = (i + 1) * n + (j + 1)
            faces.append([v00, v10, v11])
            faces.append([v00, v11, v01])
    return verts, np.asarray(faces, dtype=np.int64)


def laplacian_calculation(verts, faces):
    # equal_weight=False: neighbor weights = 1/edge_length, rows normalized to 1.
    # TODO(synk): trimesh is unavailable in-sandbox; this numpy reimplementation
    # matches trimesh.smoothing.laplacian_calculation(equal_weight=False).
    N = verts.shape[0]
    W = np.zeros((N, N), dtype=np.float64)
    for tri in faces:
        for a, b in ((0, 1), (1, 2), (2, 0)):
            i, j = int(tri[a]), int(tri[b])
            d = float(np.linalg.norm(verts[i] - verts[j]))
            w = 1.0 / max(d, 1e-12)
            W[i, j] = w
            W[j, i] = w
    row_sum = W.sum(axis=1, keepdims=True)
    row_sum[row_sum == 0.0] = 1.0
    return (W / row_sum).astype(np.float32)


class LaplacianLossJAX:
    """JAX/Pallas port of LaplacianLoss (forward only)."""

    def __init__(self, verts, faces, mask=None, matmul_dtype=None):
        verts = np.asarray(verts, dtype=np.float32)
        L = laplacian_calculation(verts, faces)            # (N, N) dense f32
        N = verts.shape[0]
        if mask is None:
            mask = np.arange(N, dtype=np.int64)
        mask = np.asarray(mask, dtype=np.int64)            # assumed unique ids
        delta_V = L @ verts                                # (N, 3) f32 buffer

        vmem_bytes, kind = _detect_tpu()
        if matmul_dtype is None:
            # bf16 L stream halves HBM bytes and lifts the f32 multi-pass MXU
            # bottleneck; default it on v5e (where f32 is near MXU-bound).
            matmul_dtype = jnp.bfloat16 if _is_v5e(kind) else jnp.float32

        M = int(mask.shape[0])
        itemsize = jnp.dtype(matmul_dtype).itemsize
        tm, tk, vp_resident, vmem_limit = _plan_tiles(M, N, itemsize, vmem_bytes)
        m_pad = _round_up(_round_up(M, _SUB), tm)
        n_pad = _round_up(_round_up(N, _LANE), tk)

        # Pre-gathered, pre-padded, pre-cast kernel operands (hoisted out of
        # the per-call path: no padded copy of L is rebuilt per forward).
        l_np = np.zeros((m_pad, n_pad), dtype=np.float32)
        l_np[:M, :N] = L[mask]
        dv_np = np.zeros((m_pad, _LANE), dtype=np.float32)
        dv_np[:M, :3] = delta_V[mask]
        self._l_p = jnp.asarray(l_np, dtype=matmul_dtype)
        self._dv_p = jnp.asarray(dv_np, dtype=jnp.float32)

        self.laplacian = jnp.asarray(L, jnp.float32)
        self.delta_V = jnp.asarray(delta_V, jnp.float32)
        self.mask = mask
        self.matmul_dtype = matmul_dtype

        self._loss_fn = jax.jit(functools.partial(
            _laplacian_loss_from_padded, n=N, tm=tm, tk=tk,
            vp_resident=vp_resident, vmem_limit_bytes=vmem_limit))

    def __call__(self, v_prime):
        return self._loss_fn(self._l_p, v_prime, self._dv_p)


if __name__ == "__main__":
    # Small deterministic problem: 8x8 grid mesh -> N = 64 vertices, 98 faces.
    verts, faces = build_grid_mesh(n=8)
    mask = np.arange(48, dtype=np.int64)                   # subset of vertices

    key = jax.random.PRNGKey(0)
    v_prime = jnp.asarray(verts) + 0.05 * jax.random.normal(
        key, verts.shape, dtype=jnp.float32)

    # Pure-numpy forward reference.
    L_np = laplacian_calculation(verts, faces)
    vp_np = np.asarray(v_prime)
    dv_np = L_np @ verts.astype(np.float32)

    # ---- f32 path: matches the PyTorch f32 forward ------------------------
    mod_f32 = LaplacianLossJAX(verts, faces, mask=mask,
                               matmul_dtype=jnp.float32)
    loss_f32 = jax.block_until_ready(mod_f32(v_prime))
    ref_f32 = np.sum((L_np @ vp_np - dv_np)[mask] ** 2)
    np.testing.assert_allclose(np.asarray(loss_f32), ref_f32,
                               rtol=1e-4, atol=1e-5)

    # ---- bf16-streamed path (halves HBM bytes; default on v5e) ------------
    # Note: both MXU operands (L and V') are cast to bf16; accumulation and
    # the epilogue stay f32.
    mod_bf16 = LaplacianLossJAX(verts, faces, mask=mask,
                                matmul_dtype=jnp.bfloat16)
    loss_bf16 = jax.block_until_ready(mod_bf16(v_prime))
    l_bf = np.asarray(jnp.asarray(L_np[mask], jnp.bfloat16).astype(jnp.float32))
    vp_bf = np.asarray(jnp.asarray(vp_np, jnp.bfloat16).astype(jnp.float32))
    ref_bf16 = np.sum((l_bf @ vp_bf - dv_np[mask]) ** 2)
    np.testing.assert_allclose(np.asarray(loss_bf16), ref_bf16,
                               rtol=5e-3, atol=1e-5)

    print("KERNEL_OK")
</pallas_src>

<mosaic_0001>
module attributes {stable_mosaic.version = 11 : i64} {
  func.func @_laplacian_loss_kernel(%arg0: i32, %arg1: i32, %arg2: memref<24x128xf32, #tpu.memory_space<vmem>>, %arg3: memref<128x128xf32, #tpu.memory_space<vmem>>, %arg4: memref<24x128xf32, #tpu.memory_space<vmem>>, %arg5: memref<8x128xf32, #tpu.memory_space<vmem>>, %arg6: memref<24x128xf32, #tpu.memory_space<vmem>>) attributes {dimension_semantics = [#tpu.dimension_semantics<parallel>, #tpu.dimension_semantics<arbitrary>], iteration_bounds = array<i64: 2, 1>, scalar_prefetch = 0 : i64, scratch_operands = 1 : i64, tpu.core_type = #tpu.core_type<tc>, window_params = [{transform_indices = @transform_0, window_bounds = array<i64: 24, 128>}, {pipeline_mode = #tpu.pipeline_mode<synchronous>, transform_indices = @transform_1, window_bounds = array<i64: 128, 128>}, {transform_indices = @transform_2, window_bounds = array<i64: 24, 128>}, {transform_indices = @transform_3, window_bounds = array<i64: 8, 128>}]} {
    %c0_i32 = arith.constant 0 : i32
    %0 = arith.cmpi eq, %arg1, %c0_i32 : i32
    %1 = arith.extui %0 : i1 to i32
    %c0_i32_0 = arith.constant 0 : i32
    %2 = arith.cmpi ne, %1, %c0_i32_0 : i32
    scf.if %2 {
      %cst_9 = arith.constant 0.000000e+00 : f32
      %15 = vector.broadcast %cst_9 : f32 to vector<24x128xf32>
      %c0_10 = arith.constant 0 : index
      %c0_11 = arith.constant 0 : index
      %16 = vector.load %arg6[%c0_10, %c0_11] : memref<24x128xf32, #tpu.memory_space<vmem>>, vector<24x128xf32>
      tpu.vector_store %arg6[%c0_10, %c0_11], %15 {strides = array<i32>} : memref<24x128xf32, #tpu.memory_space<vmem>>, vector<24x128xf32>,
    } else {
    }
    %c128_i32 = arith.constant 128 : i32
    %3 = arith.muli %arg1, %c128_i32 : i32
    %4 = tpu.assume_multiple %3, 128 : i32
    %5 = arith.index_cast %4 : i32 to index
    %c0 = arith.constant 0 : index
    %6 = vector.load %arg3[%5, %c0] : memref<128x128xf32, #tpu.memory_space<vmem>>, vector<128x128xf32>
    %c0_1 = arith.constant 0 : index
    %c0_2 = arith.constant 0 : index
    %7 = vector.load %arg6[%c0_1, %c0_2] : memref<24x128xf32, #tpu.memory_space<vmem>>, vector<24x128xf32>
    %c0_3 = arith.constant 0 : index
    %c0_4 = arith.constant 0 : index
    %8 = vector.load %arg2[%c0_3, %c0_4] : memref<24x128xf32, #tpu.memory_space<vmem>>, vector<24x128xf32>
    %cst = arith.constant dense<0.000000e+00> : vector<24x128xf32>
    %9 = tpu.matmul %8, %6, %cst {dimension_numbers = #tpu.dot_dimension_numbers<[1], [0], [0], [1], [0, 0, 1, 1], [], []>} : vector<24x128xf32>, vector<128x128xf32>, vector<24x128xf32> -> vector<24x128xf32>
    %10 = arith.addf %7, %9 : vector<24x128xf32>
    %c0_5 = arith.constant 0 : index
    %c0_6 = arith.constant 0 : index
    %11 = vector.load %arg6[%c0_5, %c0_6] : memref<24x128xf32, #tpu.memory_space<vmem>>, vector<24x128xf32>
    tpu.vector_store %arg6[%c0_5, %c0_6], %10 {strides = array<i32>} : memref<24x128xf32, #tpu.memory_space<vmem>>, vector<24x128xf32>,
    %c0_i32_7 = arith.constant 0 : i32
    %12 = arith.cmpi eq, %arg1, %c0_i32_7 : i32
    %13 = arith.extui %12 : i1 to i32
    %c0_i32_8 = arith.constant 0 : i32
    %14 = arith.cmpi ne, %13, %c0_i32_8 : i32
    scf.if %14 {
      %c0_9 = arith.constant 0 : index
      %c0_10 = arith.constant 0 : index
      %15 = vector.load %arg6[%c0_9, %c0_10] : memref<24x128xf32, #tpu.memory_space<vmem>>, vector<24x128xf32>
      %c0_11 = arith.constant 0 : index
      %c0_12 = arith.constant 0 : index
      %16 = vector.load %arg4[%c0_11, %c0_12] : memref<24x128xf32, #tpu.memory_space<vmem>>, vector<24x128xf32>
      %17 = arith.subf %15, %16 : vector<24x128xf32>
      %18 = arith.mulf %17, %17 : vector<24x128xf32>
      %19 = vector.shape_cast %18 : vector<24x128xf32> to vector<3x8x128xf32>
      %cst_13 = arith.constant dense<0.000000e+00> : vector<8x128xf32>
      %20 = vector.multi_reduction <add>, %19, %cst_13 [0] : vector<3x8x128xf32> to vector<8x128xf32>
      %c0_14 = arith.constant 0 : index
      %c0_15 = arith.constant 0 : index
      %21 = vector.load %arg5[%c0_14, %c0_15] : memref<8x128xf32, #tpu.memory_space<vmem>>, vector<8x128xf32>
      tpu.vector_store %arg5[%c0_14, %c0_15], %20 {strides = array<i32>} : memref<8x128xf32, #tpu.memory_space<vmem>>, vector<8x128xf32>,
    } else {
    }
    return
  }
  func.func @transform_0(%arg0: i32, %arg1: i32) -> (i32, i32) {
    %c0_i32 = arith.constant 0 : i32
    return %arg0, %arg1 : i32, i32
  }
  func.func @transform_1(%arg0: i32, %arg1: i32) -> (i32, i32) {
    %c0_i32 = arith.constant 0 : i32
    %c0_i32_0 = arith.constant 0 : i32
    %c0_i32_1 = arith.constant 0 : i32
    return %c0_i32, %c0_i32_0 : i32, i32
  }
  func.func @transform_2(%arg0: i32, %arg1: i32) -> (i32, i32) {
    %c0_i32 = arith.constant 0 : i32
    %c0_i32_0 = arith.constant 0 : i32
    return %arg0, %c0_i32 : i32, i32
  }
  func.func @transform_3(%arg0: i32, %arg1: i32) -> (i32, i32) {
    %c0_i32 = arith.constant 0 : i32
    %c0_i32_0 = arith.constant 0 : i32
    return %arg0, %c0_i32 : i32, i32
  }
}

</mosaic_0001>

<llo_original>
// kernel: _laplacian_loss_from_padded.1
$region0: #{_laplacian_loss_from_padded.1}
  #allocation0 [shape = 'u32[]', space=smem, size = 0x4, offset = 0x4, fixed_abs, tag = 'smem constant byte address 0x4 - core index']
  #allocation1 [shape = 'u32[144,128]{1,0:T(1,128)}', space=vmem, size = 0x12000, scoped, tag = 'internal scratch']
  #allocation2 [shape = 'f32[24,128]{1,0:T(8,128)}', space=vmem, size = 0x3000, scoped, tag = 'scratch operand']
  %s0 = inlined_call_operand.vmem [shape: f32[48,128], index: 0, kind: input, shape index: {}]
  %s1 = inlined_call_operand.vmem [shape: f32[128,128], index: 1, kind: input, shape index: {}]
  %s2 = inlined_call_operand.vmem [shape: f32[48,128], index: 2, kind: input, shape index: {}]
  %s3 = inlined_call_operand.vmem [shape: f32[16,128], index: 3, kind: output, shape index: {}]
  %s4 = sld [smem:[#allocation0]]
  $region53: #{_laplacian_loss_from_padded.1} parent=0
    _
  %s6 = ssub.s32 1, %s4
  %s7 = scalar_select 0, %s6, %s4
  loop: start=0, step=1, limit=4
  $region2: #{_laplacian_loss_from_padded.1} parent=0 // loop_pre_header
    _
  $region3: #{_laplacian_loss_from_padded.1} parent=0 // loop_header
    %s9 = sphi 0, %s13
    %p10 = scmp.ge.s32.totalorder %s9, 4
    %s16 = sphi 0, %s28
    %s17 = sphi 0, %s24
    %s18 = sphi 0, %s16
    %s19 = sphi 0, %s17
    %s20 = sphi 0, %s18
    %s21 = sphi 0, %s19
    %s33 = sphi 0, %s35
    %s36 = sphi 0, %s33
    %s37 = sphi 0, %s36
    %s53 = sphi 0, %s37
    %s57 = sphi 0, %s57
    %s59 = sphi 0, %s57
    %s60 = sphi 0, %s59
    %s74 = sphi 0, %s60
    %s80 = sphi 0, %s82
    %s83 = sphi 0, %s80
    %s84 = sphi 0, %s83
    %s100 = sphi 0, %s84
    %s106 = sphi 0, %s108
    %s109 = sphi 0, %s106
    %s110 = sphi 0, %s109
    %s126 = sphi 0, %s110
  $region4: #{_laplacian_loss_from_padded.1} parent=0 // loop_header_branch
    %12 = sbr.rel (%p10) target = $region8
  $region5: #{_laplacian_loss_from_padded.1} parent=0 // loop_body
    %s14 = ssub.s32 %s9, 1
    %s15 = ssub.s32 %s9, 2
    %s22 = sadd.s32 1, %s17
    %p23 = scmp.ge.s32.totalorder %s22, 1
    %s24 = scalar_select %p23, 0, %s22
    %s25 = sadd.s32 1, %s16
    %s26 = scalar_select %p23, %s25, %s16
    %p27 = scmp.ge.s32.totalorder %s26, 2
    %s28 = scalar_select %p27, 0, %s26
    %s29 = ssub.s32 %s16, %s28
    %s30 = ssub.s32 %s17, %s24
    %s31 = sor.u32 %s29, %s30
    %p32 = scmp.eq.s32.totalorder %s31, 0
    %s34 = sadd.s32 %s33, 1
    %s35 = scalar_select %p32, %s33, %s34
    %p38 = pneg %p32
    %p39 = scmp.eq.s32.totalorder %s9, 1
    %p40 = por %p38, %p39
    %p41 = scmp.ne.s32.totalorder %s33, %s36
    %p42 = scmp.eq.s32.totalorder %s9, 0
    %p43 = por %p41, %p42
    %p44 = scmp.ne.s32.totalorder %s33, %s36
    %p45 = scmp.eq.s32.totalorder %s14, 1
    %p46 = por %p44, %p45
    %p47 = scmp.ne.s32.totalorder %s36, %s37
    %p48 = scmp.eq.s32.totalorder %s14, 0
    %p49 = por %p47, %p48
    %p50 = scmp.ne.s32.totalorder %s36, %s37
    %p51 = scmp.eq.s32.totalorder %s15, 1
    %p52 = por %p50, %p51
    %p54 = scmp.ne.s32.totalorder %s37, %s53
    %p55 = scmp.eq.s32.totalorder %s15, 0
    %p56 = por %p54, %p55
    %s58 = sadd.s32 %s57, 1
    %p61 = scmp.eq.s32.totalorder %s9, 1
    %p62 = scmp.ne.s32.totalorder %s57, %s59
    %p63 = scmp.eq.s32.totalorder %s9, 0
    %p64 = por %p62, %p63
    %p65 = scmp.ne.s32.totalorder %s57, %s59
    %p66 = scmp.eq.s32.totalorder %s14, 1
    %p67 = por %p65, %p66
    %p68 = scmp.ne.s32.totalorder %s59, %s60
    %p69 = scmp.eq.s32.totalorder %s14, 0
    %p70 = por %p68, %p69
    %p71 = scmp.ne.s32.totalorder %s59, %s60
    %p72 = scmp.eq.s32.totalorder %s15, 1
    %p73 = por %p71, %p72
    %p75 = scmp.ne.s32.totalorder %s60, %s74
    %p76 = scmp.eq.s32.totalorder %s15, 0
    %p77 = por %p75, %p76
    %s78 = ssub.s32 %s16, %s28
    %p79 = scmp.eq.s32.totalorder %s78, 0
    %s81 = sadd.s32 %s80, 1
    %s82 = scalar_select %p79, %s80, %s81
    %p85 = pneg %p79
    %p86 = scmp.eq.s32.totalorder %s9, 1
    %p87 = por %p85, %p86
    %p88 = scmp.ne.s32.totalorder %s80, %s83
    %p89 = scmp.eq.s32.totalorder %s9, 0
    %p90 = por %p88, %p89
    %p91 = scmp.ne.s32.totalorder %s80, %s83
    %p92 = scmp.eq.s32.totalorder %s14, 1
    %p93 = por %p91, %p92
    %p94 = scmp.ne.s32.totalorder %s83, %s84
    %p95 = scmp.eq.s32.totalorder %s14, 0
    %p96 = por %p94, %p95
    %p97 = scmp.ne.s32.totalorder %s83, %s84
    %p98 = scmp.eq.s32.totalorder %s15, 1
    %p99 = por %p97, %p98
    %p101 = scmp.ne.s32.totalorder %s84, %s100
    %p102 = scmp.eq.s32.totalorder %s15, 0
    %p103 = por %p101, %p102
    %s104 = ssub.s32 %s16, %s28
    %p105 = scmp.eq.s32.totalorder %s104, 0
    %s107 = sadd.s32 %s106, 1
    %s108 = scalar_select %p105, %s106, %s107
    %p111 = pneg %p105
    %p112 = scmp.eq.s32.totalorder %s9, 1
    %p113 = por %p111, %p112
    %p114 = scmp.ne.s32.totalorder %s106, %s109
    %p115 = scmp.eq.s32.totalorder %s9, 0
    %p116 = por %p114, %p115
    %p117 = scmp.ne.s32.totalorder %s106, %s109
    %p118 = scmp.eq.s32.totalorder %s14, 1
    %p119 = por %p117, %p118
    %p120 = scmp.ne.s32.totalorder %s109, %s110
    %p121 = scmp.eq.s32.totalorder %s14, 0
    %p122 = por %p120, %p121
    %p123 = scmp.ne.s32.totalorder %s109, %s110
    %p124 = scmp.eq.s32.totalorder %s15, 1
    %p125 = por %p123, %p124
    %p127 = scmp.ne.s32.totalorder %s110, %s126
    %p128 = scmp.eq.s32.totalorder %s15, 0
    %p129 = por %p127, %p128
    %p130 = scmp.le.s32.totalorder 1, %s9
    %p131 = scmp.lt.s32.totalorder %s9, 3
    %p132 = pnand %p130, %p131
    %p133 = pneg %p132
    // Predicated region
    $region9: #{_laplacian_loss_from_padded.1} parent=5 // pred_check
      _
    $region10: #{_laplacian_loss_from_padded.1} parent=5 // pred_check_branch
      %135 = sbr.rel (%p132) target = $region12
    $region11: #{_laplacian_loss_from_padded.1} parent=5 // pred_region
      %s136 = ssub.s32 %s9, 1
      // Predicated region
      $region13: #{_laplacian_loss_from_padded.1} parent=11 // pred_check
        %p137 = pneg %p70
      $region14: #{_laplacian_loss_from_padded.1} parent=11 // pred_check_branch
        %139 = sbr.rel (%p137) target = $region16
      $region15: #{_laplacian_loss_from_padded.1} parent=11 // pred_region
        _
      $region16: #{_laplacian_loss_from_padded.1} parent=11 // pred_fallthru
        _
    $region12: #{_laplacian_loss_from_padded.1} parent=5 // pred_fallthru
      _
    %p140 = scmp.lt.s32.totalorder %s9, 2
    // Predicated region
    $region17: #{_laplacian_loss_from_padded.1} parent=5 // pred_check
      %p141 = pneg %p140
    $region18: #{_laplacian_loss_from_padded.1} parent=5 // pred_check_branch
      %143 = sbr.rel (%p141) target = $region20
    $region19: #{_laplacian_loss_from_padded.1} parent=5 // pred_region
      // Predicated region
      $region21: #{_laplacian_loss_from_padded.1} parent=19 // pred_check
        %p144 = pneg %p43
      $region22: #{_laplacian_loss_from_padded.1} parent=19 // pred_check_branch
        %146 = sbr.rel (%p144) target = $region24
      $region23: #{_laplacian_loss_from_padded.1} parent=19 // pred_region
        %s147 = smul.u32 3, %s16
        %p148 = scmp.lt.s32.totalorder %s147, 5
        %s149 = scalar_select %p148, %s147, 5
        %p150 = scmp.lt.s32.totalorder %s17, 0
        %s151 = scalar_select %p150, %s17, 0
        %s152 = sadd.s32 %s151, %s149
        %s153 = smul.addr %s152, 8
        %s154 = scalar_lea.vmem %s0, %s153
        %s155 = smul.u32 3, %s16
      $region24: #{_laplacian_loss_from_padded.1} parent=19 // pred_fallthru
        _
      // Predicated region
      $region25: #{_laplacian_loss_from_padded.1} parent=19 // pred_check
        %p156 = pneg %p90
      $region26: #{_laplacian_loss_from_padded.1} parent=19 // pred_check_branch
        %158 = sbr.rel (%p156) target = $region28
      $region27: #{_laplacian_loss_from_padded.1} parent=19 // pred_region
        %s159 = smul.u32 3, %s16
        %p160 = scmp.lt.s32.totalorder %s159, 5
        %s161 = scalar_select %p160, %s159, 5
        %s162 = smul.addr %s161, 8
        %s163 = scalar_lea.vmem %s2, %s162
        %s164 = smul.u32 3, %s16
      $region28: #{_laplacian_loss_from_padded.1} parent=19 // pred_fallthru
        _
    $region20: #{_laplacian_loss_from_padded.1} parent=5 // pred_fallthru
      _
    %p165 = scmp.le.s32.totalorder 1, %s9
    %p166 = scmp.lt.s32.totalorder %s9, 3
    %p167 = pnand %p165, %p166
    %p168 = pneg %p167
    // Predicated region
    $region29: #{_laplacian_loss_from_padded.1} parent=5 // pred_check
      _
    $region30: #{_laplacian_loss_from_padded.1} parent=5 // pred_check_branch
      %170 = sbr.rel (%p167) target = $region32
    $region31: #{_laplacian_loss_from_padded.1} parent=5 // pred_region
      %s171 = ssub.s32 %s9, 1
      %s172 = smul.u32 3, %s18
      %p173 = scmp.lt.s32.totalorder %s172, 5
      %s174 = scalar_select %p173, %s172, 5
      %p175 = scmp.lt.s32.totalorder %s19, 0
      %s176 = scalar_select %p175, %s19, 0
      %s177 = sadd.s32 %s176, %s174
      %s178 = smul.addr %s177, 8
      %s179 = scalar_lea.vmem %s0, %s178
      %p180 = pneg %p49
      %p181 = pneg %p46
      %p182 = pneg %p70
      %p183 = pneg %p67
      %s184 = smul.u32 3, %s18
      %p185 = scmp.lt.s32.totalorder %s184, 5
      %s186 = scalar_select %p185, %s184, 5
      %s187 = smul.addr %s186, 8
      %s188 = scalar_lea.vmem %s2, %s187
      %p189 = pneg %p96
      %p190 = pneg %p93
      %p191 = pneg %p122
      %p192 = pneg %p119
      %p193 = scmp.lt.s32.totalorder %s18, 1
      %s194 = scalar_select %p193, %s18, 1
      %s195 = smul.addr %s194, 8
      %s196 = scalar_lea.vmem %s3, %s195
      %s197 = smul.u32 3, %s18
      %p198 = scmp.lt.s32.totalorder %s197, 5
      %s199 = scalar_select %p198, %s197, 5
      %p200 = scmp.lt.s32.totalorder %s19, 0
      %s201 = scalar_select %p200, %s19, 0
      %s202 = sadd.s32 %s201, %s199
      %s203 = smul.addr %s202, 8
      %s204 = scalar_lea.vmem %s0, %s203
      %s205 = smul.u32 3, %s18
      %s206 = smul.u32 3, %s18
      %p207 = scmp.lt.s32.totalorder %s206, 5
      %s208 = scalar_select %p207, %s206, 5
      %s209 = smul.addr %s208, 8
      %s210 = scalar_lea.vmem %s2, %s209
      %s211 = smul.u32 3, %s18
      %p212 = scmp.lt.s32.totalorder %s18, 1
      %s213 = scalar_select %p212, %s18, 1
      %s214 = smul.addr %s213, 8
      %s215 = scalar_lea.vmem %s3, %s214
      %p216 = scmp.eq.s32.totalorder %s19, 0
      // Predicated region
      $region33: #{_laplacian_loss_from_padded.1} parent=31 // pred_check
        %p217 = pneg %p216
      $region34: #{_laplacian_loss_from_padded.1} parent=31 // pred_check_branch
        %219 = sbr.rel (%p217) target = $region36
      $region35: #{_laplacian_loss_from_padded.1} parent=31 // pred_region
        %220 = vst [vmem:[#allocation2] sm:$0xff] 0.0
        %221 = vst [vmem:[#allocation2 + $0x8] sm:$0xff] 0.0
        %222 = vst [vmem:[#allocation2 + $0x10] sm:$0xff] 0.0
      $region36: #{_laplacian_loss_from_padded.1} parent=31 // pred_fallthru
        _
      %s223 = smul.u32 %s19, 128
      %s224 = scalar_lea.vmem %s1, %s223
      %v225 = vld [vmem:[%s224] sm:$0xff]
      %v226 = vld [vmem:[%s224 + $0x8] sm:$0xff]
      %v227 = vld [vmem:[%s224 + $0x10] sm:$0xff]
      %v228 = vld [vmem:[%s224 + $0x18] sm:$0xff]
      %v229 = vld [vmem:[%s224 + $0x20] sm:$0xff]
      %v230 = vld [vmem:[%s224 + $0x28] sm:$0xff]
      %v231 = vld [vmem:[%s224 + $0x30] sm:$0xff]
      %v232 = vld [vmem:[%s224 + $0x38] sm:$0xff]
      %v233 = vld [vmem:[%s224 + $0x40] sm:$0xff]
      %v234 = vld [vmem:[%s224 + $0x48] sm:$0xff]
      %v235 = vld [vmem:[%s224 + $0x50] sm:$0xff]
      %v236 = vld [vmem:[%s224 + $0x58] sm:$0xff]
      %v237 = vld [vmem:[%s224 + $0x60] sm:$0xff]
      %v238 = vld [vmem:[%s224 + $0x68] sm:$0xff]
      %v239 = vld [vmem:[%s224 + $0x70] sm:$0xff]
      %v240 = vld [vmem:[%s224 + $0x78] sm:$0xff]
      %v241 = vld [vmem:[#allocation2] sm:$0xff]
      %v242 = vld [vmem:[#allocation2 + $0x8] sm:$0xff]
      %v243 = vld [vmem:[#allocation2 + $0x10] sm:$0xff]
      %v244 = vld [vmem:[%s204] sm:$0xff]
      %v245 = vld [vmem:[%s204 + $0x8] sm:$0xff]
      %v246 = vld [vmem:[%s204 + $0x10] sm:$0xff]
      %247 = vmatprep.subr.mxu0 0.0
      %248 = vmatpush1.msra.mxu0 %v240
      %249 = vmatprep.subr.mxu0 0.0
      %250 = vmatpush1.msra.mxu0 %v239
      %251 = vmatprep.subr.mxu0 0.0
      %252 = vmatpush1.msra.mxu0 %v238
      %253 = vmatprep.subr.mxu0 0.0
      %254 = vmatpush1.msra.mxu0 %v237
      %255 = vmatprep.subr.mxu0 0.0
      %256 = vmatpush1.msra.mxu0 %v236
      %257 = vmatprep.subr.mxu0 0.0
      %258 = vmatpush1.msra.mxu0 %v235
      %259 = vmatprep.subr.mxu0 0.0
      %260 = vmatpush1.msra.mxu0 %v234
      %261 = vmatprep.subr.mxu0 0.0
      %262 = vmatpush1.msra.mxu0 %v233
      %263 = vmatprep.subr.mxu0 0.0
      %264 = vmatpush1.msra.mxu0 %v232
      %265 = vmatprep.subr.mxu0 0.0
      %266 = vmatpush1.msra.mxu0 %v231
      %267 = vmatprep.subr.mxu0 0.0
      %268 = vmatpush1.msra.mxu0 %v230
      %269 = vmatprep.subr.mxu0 0.0
      %270 = vmatpush1.msra.mxu0 %v229
      %271 = vmatprep.subr.mxu0 0.0
      %272 = vmatpush1.msra.mxu0 %v228
      %273 = vmatprep.subr.mxu0 0.0
      %274 = vmatpush1.msra.mxu0 %v227
      %275 = vmatprep.subr.mxu0 0.0
      %276 = vmatpush1.msra.mxu0 %v226
      %277 = vmatprep.subr.mxu0 0.0
      %278 = vmatpush1.msra.mxu0 %v225
      %279 = vmatprep.subr.mxu0 0.0
      %280 = vmatpush2.msra.mxu0 0.0
      %281 = vmatprep.subr.mxu0 0.0
      %282 = vmatpush2.msra.mxu0 0.0
      %283 = vmatprep.subr.mxu0 0.0
      %284 = vmatpush2.msra.mxu0 0.0
      %285 = vmatprep.subr.mxu0 0.0
      %286 = vmatpush2.msra.mxu0 0.0
      %287 = vmatprep.subr.mxu0 0.0
      %288 = vmatpush2.msra.mxu0 0.0
      %289 = vmatprep.subr.mxu0 0.0
      %290 = vmatpush2.msra.mxu0 0.0
      %291 = vmatprep.subr.mxu0 0.0
      %292 = vmatpush2.msra.mxu0 0.0
      %293 = vmatprep.subr.mxu0 0.0
      %294 = vmatpush2.msra.mxu0 0.0
      %295 = vmatprep.subr.mxu0 0.0
      %296 = vmatpush2.msra.mxu0 0.0
      %297 = vmatprep.subr.mxu0 0.0
      %298 = vmatpush2.msra.mxu0 0.0
      %299 = vmatprep.subr.mxu0 0.0
      %300 = vmatpush2.msra.mxu0 0.0
      %301 = vmatprep.subr.mxu0 0.0
      %302 = vmatpush2.msra.mxu0 0.0
      %303 = vmatprep.subr.mxu0 0.0
      %304 = vmatpush2.msra.mxu0 0.0
      %305 = vmatprep.subr.mxu0 0.0
      %306 = vmatpush2.msra.mxu0 0.0
      %307 = vmatprep.subr.mxu0 0.0
      %308 = vmatpush2.msra.mxu0 0.0
      %309 = vmatprep.subr.mxu0 0.0
      %310 = vmatpush2.msra.mxu0 0.0
      %311 = vmatprep.mubr.f32.mxu0 0.0
      %312 = vmatmul.mubr.f32.gmra.mxu0 %v244
      %v313 = vpop.f32.mrf.mxu0
      %v314 = vadd.f32 0.0, %v313
      %v315 = vpop.f32.mrf.mxu0
      %316 = vmatprep.mubr.f32.mxu0 0.0
      %317 = vmatmul.mubr.f32.gmra.mxu0 %v245
      %v318 = vpop.f32.mrf.mxu0
      %v319 = vadd.f32 0.0, %v318
      %v320 = vpop.f32.mrf.mxu0
      %321 = vmatprep.mubr.f32.mxu0 0.0
      %322 = vmatmul.mubr.f32.gmra.mxu0 %v246
      %v323 = vpop.f32.mrf.mxu0
      %v324 = vadd.f32 0.0, %v323
      %v325 = vpop.f32.mrf.mxu0
      %326 = vdwg.mxu0
      %v327 = vadd.f32 %v241, %v314
      %v328 = vadd.f32 %v242, %v319
      %v329 = vadd.f32 %v243, %v324
      %330 = vst [vmem:[#allocation2] sm:$0xff] %v327
      %331 = vst [vmem:[#allocation2 + $0x8] sm:$0xff] %v328
      %332 = vst [vmem:[#allocation2 + $0x10] sm:$0xff] %v329
      // Predicated region
      $region37: #{_laplacian_loss_from_padded.1} parent=31 // pred_check
        %p333 = pneg %p216
      $region38: #{_laplacian_loss_from_padded.1} parent=31 // pred_check_branch
        %335 = sbr.rel (%p333) target = $region40
      $region39: #{_laplacian_loss_from_padded.1} parent=31 // pred_region
        %v336 = vld [vmem:[#allocation2] sm:$0xff]
        %v337 = vld [vmem:[#allocation2 + $0x8] sm:$0xff]
        %v338 = vld [vmem:[#allocation2 + $0x10] sm:$0xff]
        %v339 = vld [vmem:[%s210] sm:$0xff]
        %v340 = vld [vmem:[%s210 + $0x8] sm:$0xff]
        %v341 = vld [vmem:[%s210 + $0x10] sm:$0xff]
        %v342 = vsub.f32 %v336, %v339
        %v343 = vsub.f32 %v337, %v340
        %v344 = vsub.f32 %v338, %v341
        %v345 = vmul.f32 %v342, %v342
        %v346 = vmul.f32 %v343, %v343
        %v347 = vmul.f32 %v344, %v344
        %v348 = vadd.f32 %v345, %v346
        %v349 = vadd.f32 %v348, %v347
        %350 = vst [vmem:[%s215] sm:$0xff] %v349
      $region40: #{_laplacian_loss_from_padded.1} parent=31 // pred_fallthru
        _
      %p351 = scmp.lt.s32.totalorder %s18, 1
      %s352 = scalar_select %p351, %s18, 1
      %s353 = smul.addr %s352, 8
      %s354 = scalar_lea.vmem %s3, %s353
      // Predicated region
      $region41: #{_laplacian_loss_from_padded.1} parent=31 // pred_check
        %p355 = pneg %p119
      $region42: #{_laplacian_loss_from_padded.1} parent=31 // pred_check_branch
        %357 = sbr.rel (%p355) target = $region44
      $region43: #{_laplacian_loss_from_padded.1} parent=31 // pred_region
        _
      $region44: #{_laplacian_loss_from_padded.1} parent=31 // pred_fallthru
        _
    $region32: #{_laplacian_loss_from_padded.1} parent=5 // pred_fallthru
      _
    %p358 = scmp.le.s32.totalorder 2, %s9
    // Predicated region
    $region45: #{_laplacian_loss_from_padded.1} parent=5 // pred_check
      %p359 = pneg %p358
    $region46: #{_laplacian_loss_from_padded.1} parent=5 // pred_check_branch
      %361 = sbr.rel (%p359) target = $region48
    $region47: #{_laplacian_loss_from_padded.1} parent=5 // pred_region
      %s362 = ssub.s32 %s9, 2
      // Predicated region
      $region49: #{_laplacian_loss_from_padded.1} parent=47 // pred_check
        %p363 = pneg %p125
      $region50: #{_laplacian_loss_from_padded.1} parent=47 // pred_check_branch
        %365 = sbr.rel (%p363) target = $region52
      $region51: #{_laplacian_loss_from_padded.1} parent=47 // pred_region
        %p366 = scmp.lt.s32.totalorder %s20, 1
        %s367 = scalar_select %p366, %s20, 1
        %s368 = smul.addr %s367, 8
        %s369 = scalar_lea.vmem %s3, %s368
      $region52: #{_laplacian_loss_from_padded.1} parent=47 // pred_fallthru
        _
    $region48: #{_laplacian_loss_from_padded.1} parent=5 // pred_fallthru
      _
  $region6: #{_laplacian_loss_from_padded.1} parent=0 // loop_footer
    %s13 = sadd.s32 1, %s9
  $region7: #{_laplacian_loss_from_padded.1} parent=0 // loop_footer_branch
    %8 = sbr.rel target = $region3
  $region8: #{_laplacian_loss_from_padded.1} parent=0 // loop_exit
    _

</llo_original>
